<compile_context>
chip_gen: v5e
topology: v5e:2x2
jax: 0.10.0
libtpu: 0.0.40
codegen_flags: <defaults>
</compile_context>

<pallas_src>
import math

import jax
import jax.numpy as jnp
from jax import lax
from jax.experimental import pallas as pl
from jax.experimental.pallas import tpu as pltpu

# ---- model hyperparameters (small, consistent with the module) ----
B = 2            # batch
S = 8            # seq_len
E = 32           # embed_dim
H = 4            # num_heads
HD = E // H      # head_dim
FF = 64          # ff_dim
EPS = 1e-5
SCALE = math.sqrt(HD)
BS = B * S       # flattened token count


def encoder_block_kernel(
    x_ref,                      # (BS, E)  whole batch, single grid step
    mkc_ref,                    # (H*S, E)   mask: replicated-k row h*S+j  <-> channel head
    mss_ref,                    # (H*S, H*S) mask: score column <-> score column same head
    wqkv_ref, bqkv_ref,         # (E, 3E), (1, 3E)   fused QKV (scale folded into Q part)
    wo_ref, bo_ref,             # (E, E), (1, E)
    g1_ref, be1_ref,            # LayerNorm1
    w1_ref, b1_ref,             # FFN linear 1
    w2_ref, b2_ref,             # FFN linear 2
    g2_ref, be2_ref,            # LayerNorm2
    o_ref,                      # (BS, E)
):
    x = x_ref[...]
    m_kc = mkc_ref[...]
    m_ss = mss_ref[...]

    # ---- fused Q/K/V projection: one MXU matmul, one bias add ----
    qkv = jnp.dot(x, wqkv_ref[...], preferred_element_type=jnp.float32) + bqkv_ref[...]
    q = qkv[:, 0:E]
    k = qkv[:, E:2 * E]
    v = qkv[:, 2 * E:3 * E]

    # ---- multi-head self-attention ----
    # All H heads at once per batch element via block-diagonal masking; the batch
    # loop is a tiny unrolled loop (B=2) over sublane-aligned row slices.
    ctx_rows = []
    for b in range(B):
        r = b * S
        qb = q[r:r + S, :]                                    # (S, E)
        kb = k[r:r + S, :]
        vb = v[r:r + S, :]
        # Row h*S+j of the replicated k/v holds token j, masked to head h's channels.
        k_bdt = jnp.concatenate([kb] * H, axis=0) * m_kc      # (H*S, E)
        v_bd = jnp.concatenate([vb] * H, axis=0) * m_kc       # (H*S, E)
        # scores[i, h*S+j] = q_h[i] . k_h[j]   (A @ B^T form: contract last dims)
        s = lax.dot_general(qb, k_bdt, (((1,), (1,)), ((), ())),
                            preferred_element_type=jnp.float32)        # (S, H*S)
        # Subtracting the global row max is a valid (and stable) per-head shift.
        s = s - jnp.max(s, axis=-1, keepdims=True)
        p = jnp.exp(s)
        # Per-head row sums, broadcast to every column of that head's block.
        denom = jnp.dot(p, m_ss, preferred_element_type=jnp.float32)   # (S, H*S)
        # TODO(synk): dropout on attention weights is identity (eval mode).
        p = p * pl.reciprocal(denom, approx=True)                      # EUP, not VALU divide
        ctx_rows.append(jnp.dot(p, v_bd, preferred_element_type=jnp.float32))  # (S, E)
    ctx = jnp.concatenate(ctx_rows, axis=0)                            # (BS, E), heads concatenated in lanes

    attended = jnp.dot(ctx, wo_ref[...], preferred_element_type=jnp.float32) + bo_ref[...]

    # ---- residual + LayerNorm 1 ----
    y = x + attended
    mu = jnp.mean(y, axis=-1, keepdims=True)
    var = jnp.mean((y - mu) ** 2, axis=-1, keepdims=True)
    y1 = (y - mu) * lax.rsqrt(var + EPS) * g1_ref[...] + be1_ref[...]

    # ---- feed-forward (dropouts are identity in eval mode) ----
    h1 = jnp.dot(y1, w1_ref[...], preferred_element_type=jnp.float32) + b1_ref[...]
    h1 = jnp.maximum(h1, 0.0)
    ff = jnp.dot(h1, w2_ref[...], preferred_element_type=jnp.float32) + b2_ref[...]

    # ---- residual + LayerNorm 2 ----
    y2 = y1 + ff
    mu2 = jnp.mean(y2, axis=-1, keepdims=True)
    var2 = jnp.mean((y2 - mu2) ** 2, axis=-1, keepdims=True)
    o_ref[...] = (y2 - mu2) * lax.rsqrt(var2 + EPS) * g2_ref[...] + be2_ref[...]


def _full_spec(shape):
    # Whole-array block; grid has a single step so the index map is constant.
    return pl.BlockSpec(shape, lambda i: (0,) * len(shape))


@jax.jit
def transformer_encoder_block(x, params):
    (wq, bq, wk, bk, wv, bv, wo, bo,
     g1, be1, w1, b1, w2, b2, g2, be2) = params

    # ---- trace-time weight fusion / scale folding (constant folded by XLA) ----
    inv_scale = jnp.float32(1.0 / SCALE)
    wqkv = jnp.concatenate([wq * inv_scale, wk, wv], axis=1)   # (E, 3E)
    bqkv = jnp.concatenate([bq * inv_scale, bk, bv], axis=1)   # (1, 3E)

    # Block-diagonal head masks (constants).
    kv_head = jnp.repeat(jnp.arange(H, dtype=jnp.int32), S)          # (H*S,)
    ch_head = jnp.arange(E, dtype=jnp.int32) // HD                    # (E,)
    mask_kc = (kv_head[:, None] == ch_head[None, :]).astype(jnp.float32)   # (H*S, E)
    mask_ss = (kv_head[:, None] == kv_head[None, :]).astype(jnp.float32)   # (H*S, H*S)

    x2 = x.reshape(BS, E)   # flatten batch*seq; collapse the grid to one step

    in_specs = [
        _full_spec((BS, E)),            # x
        _full_spec((H * S, E)),         # mask_kc
        _full_spec((H * S, H * S)),     # mask_ss
        _full_spec((E, 3 * E)), _full_spec((1, 3 * E)),   # fused QKV
        _full_spec((E, E)), _full_spec((1, E)),           # output proj
        _full_spec((1, E)), _full_spec((1, E)),           # layer_norm1
        _full_spec((E, FF)), _full_spec((1, FF)),         # ff linear 1
        _full_spec((FF, E)), _full_spec((1, E)),          # ff linear 2
        _full_spec((1, E)), _full_spec((1, E)),           # layer_norm2
    ]

    out2 = pl.pallas_call(
        encoder_block_kernel,
        out_shape=jax.ShapeDtypeStruct((BS, E), jnp.float32),
        grid_spec=pltpu.PrefetchScalarGridSpec(
            num_scalar_prefetch=0,
            grid=(1,),                      # single step: no per-step pipeline overhead
            in_specs=in_specs,
            out_specs=_full_spec((BS, E)),
        ),
        # Single trivial step: don't engage megacore sharding (sub-microsecond work).
        compiler_params=pltpu.CompilerParams(dimension_semantics=("arbitrary",)),
    )(x2, mask_kc, mask_ss, wqkv, bqkv, wo, bo, g1, be1, w1, b1, w2, b2, g2, be2)

    return out2.reshape(B, S, E)


def reference(x, params):
    """Pure-JAX reference mirroring the PyTorch forward (eval mode)."""
    (wq, bq, wk, bk, wv, bv, wo, bo,
     g1, be1, w1, b1, w2, b2, g2, be2) = params

    def lin(a, w, b):
        return a @ w + b

    q = lin(x, wq, bq).reshape(B, S, H, HD).transpose(0, 2, 1, 3)
    k = lin(x, wk, bk).reshape(B, S, H, HD).transpose(0, 2, 1, 3)
    v = lin(x, wv, bv).reshape(B, S, H, HD).transpose(0, 2, 1, 3)
    scores = jnp.einsum("bhqd,bhkd->bhqk", q, k) / SCALE
    p = jax.nn.softmax(scores, axis=-1)
    o = jnp.einsum("bhqk,bhkd->bhqd", p, v).transpose(0, 2, 1, 3).reshape(B, S, E)
    attended = lin(o, wo, bo)

    def ln(a, g, be):
        mu = jnp.mean(a, axis=-1, keepdims=True)
        var = jnp.mean((a - mu) ** 2, axis=-1, keepdims=True)
        return (a - mu) * jax.lax.rsqrt(var + EPS) * g + be

    y1 = ln(x + attended, g1, be1)
    ff = lin(jnp.maximum(lin(y1, w1, b1), 0.0), w2, b2)
    return ln(y1 + ff, g2, be2)


def make_params(key):
    ks = jax.random.split(key, 12)
    s = 0.05
    wq = jax.random.normal(ks[0], (E, E), jnp.float32) * s
    bq = jax.random.normal(ks[1], (1, E), jnp.float32) * s
    wk = jax.random.normal(ks[2], (E, E), jnp.float32) * s
    bk = jax.random.normal(ks[3], (1, E), jnp.float32) * s
    wv = jax.random.normal(ks[4], (E, E), jnp.float32) * s
    bv = jax.random.normal(ks[5], (1, E), jnp.float32) * s
    wo = jax.random.normal(ks[6], (E, E), jnp.float32) * s
    bo = jax.random.normal(ks[7], (1, E), jnp.float32) * s
    g1 = jnp.ones((1, E), jnp.float32)
    be1 = jnp.zeros((1, E), jnp.float32)
    w1 = jax.random.normal(ks[8], (E, FF), jnp.float32) * s
    b1 = jax.random.normal(ks[9], (1, FF), jnp.float32) * s
    w2 = jax.random.normal(ks[10], (FF, E), jnp.float32) * s
    b2 = jax.random.normal(ks[11], (1, E), jnp.float32) * s
    g2 = jnp.ones((1, E), jnp.float32)
    be2 = jnp.zeros((1, E), jnp.float32)
    return (wq, bq, wk, bk, wv, bv, wo, bo, g1, be1, w1, b1, w2, b2, g2, be2)


if __name__ == "__main__":
    key = jax.random.PRNGKey(0)
    kx, kp = jax.random.split(key)
    x = jax.random.normal(kx, (B, S, E), jnp.float32)
    params = make_params(kp)

    out = jax.block_until_ready(transformer_encoder_block(x, params))
    ref = reference(x, params)

    assert out.shape == (B, S, E)
    max_err = float(jnp.max(jnp.abs(out - ref)))
    # Tolerance covers the EUP approximate reciprocal in the softmax normalization.
    assert jnp.allclose(out, ref, rtol=2e-3, atol=2e-3), f"mismatch vs JAX reference (max abs err {max_err})"

    print("KERNEL_OK")
</pallas_src>

<mosaic_0001>
module attributes {stable_mosaic.version = 11 : i64} {
  func.func @encoder_block_kernel(%arg0: i32, %arg1: memref<16x32xf32, #tpu.memory_space<vmem>>, %arg2: memref<32x32xf32, #tpu.memory_space<vmem>>, %arg3: memref<32x32xf32, #tpu.memory_space<vmem>>, %arg4: memref<32x96xf32, #tpu.memory_space<vmem>>, %arg5: memref<1x96xf32, #tpu.memory_space<vmem>>, %arg6: memref<32x32xf32, #tpu.memory_space<vmem>>, %arg7: memref<1x32xf32, #tpu.memory_space<vmem>>, %arg8: memref<1x32xf32, #tpu.memory_space<vmem>>, %arg9: memref<1x32xf32, #tpu.memory_space<vmem>>, %arg10: memref<32x64xf32, #tpu.memory_space<vmem>>, %arg11: memref<1x64xf32, #tpu.memory_space<vmem>>, %arg12: memref<64x32xf32, #tpu.memory_space<vmem>>, %arg13: memref<1x32xf32, #tpu.memory_space<vmem>>, %arg14: memref<1x32xf32, #tpu.memory_space<vmem>>, %arg15: memref<1x32xf32, #tpu.memory_space<vmem>>, %arg16: memref<16x32xf32, #tpu.memory_space<vmem>>) attributes {dimension_semantics = [#tpu.dimension_semantics<arbitrary>], iteration_bounds = array<i64: 1>, scalar_prefetch = 0 : i64, scratch_operands = 0 : i64, tpu.core_type = #tpu.core_type<tc>, window_params = [{pipeline_mode = #tpu.pipeline_mode<synchronous>, transform_indices = @transform_0, window_bounds = array<i64: 16, 32>}, {pipeline_mode = #tpu.pipeline_mode<synchronous>, transform_indices = @transform_1, window_bounds = array<i64: 32, 32>}, {pipeline_mode = #tpu.pipeline_mode<synchronous>, transform_indices = @transform_2, window_bounds = array<i64: 32, 32>}, {pipeline_mode = #tpu.pipeline_mode<synchronous>, transform_indices = @transform_3, window_bounds = array<i64: 32, 96>}, {pipeline_mode = #tpu.pipeline_mode<synchronous>, transform_indices = @transform_4, window_bounds = array<i64: 1, 96>}, {pipeline_mode = #tpu.pipeline_mode<synchronous>, transform_indices = @transform_5, window_bounds = array<i64: 32, 32>}, {pipeline_mode = #tpu.pipeline_mode<synchronous>, transform_indices = @transform_6, window_bounds = array<i64: 1, 32>}, {pipeline_mode = #tpu.pipeline_mode<synchronous>, transform_indices = @transform_7, window_bounds = array<i64: 1, 32>}, {pipeline_mode = #tpu.pipeline_mode<synchronous>, transform_indices = @transform_8, window_bounds = array<i64: 1, 32>}, {pipeline_mode = #tpu.pipeline_mode<synchronous>, transform_indices = @transform_9, window_bounds = array<i64: 32, 64>}, {pipeline_mode = #tpu.pipeline_mode<synchronous>, transform_indices = @transform_10, window_bounds = array<i64: 1, 64>}, {pipeline_mode = #tpu.pipeline_mode<synchronous>, transform_indices = @transform_11, window_bounds = array<i64: 64, 32>}, {pipeline_mode = #tpu.pipeline_mode<synchronous>, transform_indices = @transform_12, window_bounds = array<i64: 1, 32>}, {pipeline_mode = #tpu.pipeline_mode<synchronous>, transform_indices = @transform_13, window_bounds = array<i64: 1, 32>}, {pipeline_mode = #tpu.pipeline_mode<synchronous>, transform_indices = @transform_14, window_bounds = array<i64: 1, 32>}, {pipeline_mode = #tpu.pipeline_mode<synchronous>, transform_indices = @transform_15, window_bounds = array<i64: 16, 32>}]} {
    %c0 = arith.constant 0 : index
    %c0_0 = arith.constant 0 : index
    %0 = vector.load %arg1[%c0, %c0_0] : memref<16x32xf32, #tpu.memory_space<vmem>>, vector<16x32xf32>
    %c0_1 = arith.constant 0 : index
    %c0_2 = arith.constant 0 : index
    %1 = vector.load %arg2[%c0_1, %c0_2] : memref<32x32xf32, #tpu.memory_space<vmem>>, vector<32x32xf32>
    %c0_3 = arith.constant 0 : index
    %c0_4 = arith.constant 0 : index
    %2 = vector.load %arg3[%c0_3, %c0_4] : memref<32x32xf32, #tpu.memory_space<vmem>>, vector<32x32xf32>
    %c0_5 = arith.constant 0 : index
    %c0_6 = arith.constant 0 : index
    %3 = vector.load %arg4[%c0_5, %c0_6] : memref<32x96xf32, #tpu.memory_space<vmem>>, vector<32x96xf32>
    %cst = arith.constant dense<0.000000e+00> : vector<16x96xf32>
    %4 = tpu.matmul %0, %3, %cst {dimension_numbers = #tpu.dot_dimension_numbers<[1], [0], [0], [1], [0, 0, 1, 1], [], []>} : vector<16x32xf32>, vector<32x96xf32>, vector<16x96xf32> -> vector<16x96xf32>
    %c0_7 = arith.constant 0 : index
    %c0_8 = arith.constant 0 : index
    %5 = vector.load %arg5[%c0_7, %c0_8] : memref<1x96xf32, #tpu.memory_space<vmem>>, vector<1x96xf32>
    %6 = vector.broadcast %5 : vector<1x96xf32> to vector<16x96xf32>
    %7 = arith.addf %4, %6 : vector<16x96xf32>
    %8 = vector.extract_strided_slice %7 {offsets = [0, 0], sizes = [16, 32], strides = [1, 1]} : vector<16x96xf32> to vector<16x32xf32>
    %9 = vector.extract_strided_slice %7 {offsets = [0, 32], sizes = [16, 32], strides = [1, 1]} : vector<16x96xf32> to vector<16x32xf32>
    %10 = vector.extract_strided_slice %7 {offsets = [0, 64], sizes = [16, 32], strides = [1, 1]} : vector<16x96xf32> to vector<16x32xf32>
    %11 = vector.extract_strided_slice %8 {offsets = [0, 0], sizes = [8, 32], strides = [1, 1]} : vector<16x32xf32> to vector<8x32xf32>
    %12 = vector.extract_strided_slice %9 {offsets = [0, 0], sizes = [8, 32], strides = [1, 1]} : vector<16x32xf32> to vector<8x32xf32>
    %13 = vector.extract_strided_slice %10 {offsets = [0, 0], sizes = [8, 32], strides = [1, 1]} : vector<16x32xf32> to vector<8x32xf32>
    %14 = tpu.concatenate %12, %12, %12, %12 in 0 : vector<8x32xf32>, vector<8x32xf32>, vector<8x32xf32>, vector<8x32xf32> -> vector<32x32xf32>
    %15 = arith.mulf %14, %1 : vector<32x32xf32>
    %16 = tpu.concatenate %13, %13, %13, %13 in 0 : vector<8x32xf32>, vector<8x32xf32>, vector<8x32xf32>, vector<8x32xf32> -> vector<32x32xf32>
    %17 = arith.mulf %16, %1 : vector<32x32xf32>
    %cst_9 = arith.constant dense<0.000000e+00> : vector<8x32xf32>
    %18 = tpu.matmul %11, %15, %cst_9 {dimension_numbers = #tpu.dot_dimension_numbers<[1], [1], [0], [0], [0, 0, 1, 0], [], []>} : vector<8x32xf32>, vector<32x32xf32>, vector<8x32xf32> -> vector<8x32xf32>
    %cst_10 = arith.constant dense<0xFF800000> : vector<8xf32>
    %19 = vector.multi_reduction <maximumf>, %18, %cst_10 [1] : vector<8x32xf32> to vector<8xf32>
    %20 = vector.shape_cast %19 : vector<8xf32> to vector<8x1xf32>
    %21 = vector.broadcast %20 : vector<8x1xf32> to vector<8x32xf32>
    %22 = arith.subf %18, %21 : vector<8x32xf32>
    %23 = math.exp %22 : vector<8x32xf32>
    %cst_11 = arith.constant dense<0.000000e+00> : vector<8x32xf32>
    %24 = tpu.matmul %23, %2, %cst_11 {dimension_numbers = #tpu.dot_dimension_numbers<[1], [0], [0], [1], [0, 0, 1, 1], [], []>} : vector<8x32xf32>, vector<32x32xf32>, vector<8x32xf32> -> vector<8x32xf32>
    %25 = tpu.reciprocal %24 {approx = true} : vector<8x32xf32> -> vector<8x32xf32>
    %26 = arith.mulf %23, %25 : vector<8x32xf32>
    %cst_12 = arith.constant dense<0.000000e+00> : vector<8x32xf32>
    %27 = tpu.matmul %26, %17, %cst_12 {dimension_numbers = #tpu.dot_dimension_numbers<[1], [0], [0], [1], [0, 0, 1, 1], [], []>} : vector<8x32xf32>, vector<32x32xf32>, vector<8x32xf32> -> vector<8x32xf32>
    %28 = vector.extract_strided_slice %8 {offsets = [8, 0], sizes = [8, 32], strides = [1, 1]} : vector<16x32xf32> to vector<8x32xf32>
    %29 = vector.extract_strided_slice %9 {offsets = [8, 0], sizes = [8, 32], strides = [1, 1]} : vector<16x32xf32> to vector<8x32xf32>
    %30 = vector.extract_strided_slice %10 {offsets = [8, 0], sizes = [8, 32], strides = [1, 1]} : vector<16x32xf32> to vector<8x32xf32>
    %31 = tpu.concatenate %29, %29, %29, %29 in 0 : vector<8x32xf32>, vector<8x32xf32>, vector<8x32xf32>, vector<8x32xf32> -> vector<32x32xf32>
    %32 = arith.mulf %31, %1 : vector<32x32xf32>
    %33 = tpu.concatenate %30, %30, %30, %30 in 0 : vector<8x32xf32>, vector<8x32xf32>, vector<8x32xf32>, vector<8x32xf32> -> vector<32x32xf32>
    %34 = arith.mulf %33, %1 : vector<32x32xf32>
    %cst_13 = arith.constant dense<0.000000e+00> : vector<8x32xf32>
    %35 = tpu.matmul %28, %32, %cst_13 {dimension_numbers = #tpu.dot_dimension_numbers<[1], [1], [0], [0], [0, 0, 1, 0], [], []>} : vector<8x32xf32>, vector<32x32xf32>, vector<8x32xf32> -> vector<8x32xf32>
    %cst_14 = arith.constant dense<0xFF800000> : vector<8xf32>
    %36 = vector.multi_reduction <maximumf>, %35, %cst_14 [1] : vector<8x32xf32> to vector<8xf32>
    %37 = vector.shape_cast %36 : vector<8xf32> to vector<8x1xf32>
    %38 = vector.broadcast %37 : vector<8x1xf32> to vector<8x32xf32>
    %39 = arith.subf %35, %38 : vector<8x32xf32>
    %40 = math.exp %39 : vector<8x32xf32>
    %cst_15 = arith.constant dense<0.000000e+00> : vector<8x32xf32>
    %41 = tpu.matmul %40, %2, %cst_15 {dimension_numbers = #tpu.dot_dimension_numbers<[1], [0], [0], [1], [0, 0, 1, 1], [], []>} : vector<8x32xf32>, vector<32x32xf32>, vector<8x32xf32> -> vector<8x32xf32>
    %42 = tpu.reciprocal %41 {approx = true} : vector<8x32xf32> -> vector<8x32xf32>
    %43 = arith.mulf %40, %42 : vector<8x32xf32>
    %cst_16 = arith.constant dense<0.000000e+00> : vector<8x32xf32>
    %44 = tpu.matmul %43, %34, %cst_16 {dimension_numbers = #tpu.dot_dimension_numbers<[1], [0], [0], [1], [0, 0, 1, 1], [], []>} : vector<8x32xf32>, vector<32x32xf32>, vector<8x32xf32> -> vector<8x32xf32>
    %45 = tpu.concatenate %27, %44 in 0 : vector<8x32xf32>, vector<8x32xf32> -> vector<16x32xf32>
    %c0_17 = arith.constant 0 : index
    %c0_18 = arith.constant 0 : index
    %46 = vector.load %arg6[%c0_17, %c0_18] : memref<32x32xf32, #tpu.memory_space<vmem>>, vector<32x32xf32>
    %cst_19 = arith.constant dense<0.000000e+00> : vector<16x32xf32>
    %47 = tpu.matmul %45, %46, %cst_19 {dimension_numbers = #tpu.dot_dimension_numbers<[1], [0], [0], [1], [0, 0, 1, 1], [], []>} : vector<16x32xf32>, vector<32x32xf32>, vector<16x32xf32> -> vector<16x32xf32>
    %c0_20 = arith.constant 0 : index
    %c0_21 = arith.constant 0 : index
    %48 = vector.load %arg7[%c0_20, %c0_21] : memref<1x32xf32, #tpu.memory_space<vmem>>, vector<1x32xf32>
    %49 = vector.broadcast %48 : vector<1x32xf32> to vector<16x32xf32>
    %50 = arith.addf %47, %49 : vector<16x32xf32>
    %51 = arith.addf %0, %50 : vector<16x32xf32>
    %cst_22 = arith.constant dense<0.000000e+00> : vector<16xf32>
    %52 = vector.multi_reduction <add>, %51, %cst_22 [1] : vector<16x32xf32> to vector<16xf32>
    %53 = vector.shape_cast %52 : vector<16xf32> to vector<16x1xf32>
    %cst_23 = arith.constant 3.200000e+01 : f32
    %54 = vector.broadcast %cst_23 : f32 to vector<16x1xf32>
    %55 = arith.divf %53, %54 : vector<16x1xf32>
    %56 = vector.broadcast %55 : vector<16x1xf32> to vector<16x32xf32>
    %57 = arith.subf %51, %56 : vector<16x32xf32>
    %58 = arith.mulf %57, %57 : vector<16x32xf32>
    %cst_24 = arith.constant dense<0.000000e+00> : vector<16xf32>
    %59 = vector.multi_reduction <add>, %58, %cst_24 [1] : vector<16x32xf32> to vector<16xf32>
    %60 = vector.shape_cast %59 : vector<16xf32> to vector<16x1xf32>
    %cst_25 = arith.constant 3.200000e+01 : f32
    %61 = vector.broadcast %cst_25 : f32 to vector<16x1xf32>
    %62 = arith.divf %60, %61 : vector<16x1xf32>
    %63 = vector.broadcast %55 : vector<16x1xf32> to vector<16x32xf32>
    %64 = arith.subf %51, %63 : vector<16x32xf32>
    %cst_26 = arith.constant 9.99999974E-6 : f32
    %65 = vector.broadcast %cst_26 : f32 to vector<16x1xf32>
    %66 = arith.addf %62, %65 : vector<16x1xf32>
    %67 = math.rsqrt %66 : vector<16x1xf32>
    %68 = vector.broadcast %67 : vector<16x1xf32> to vector<16x32xf32>
    %69 = arith.mulf %64, %68 : vector<16x32xf32>
    %c0_27 = arith.constant 0 : index
    %c0_28 = arith.constant 0 : index
    %70 = vector.load %arg8[%c0_27, %c0_28] : memref<1x32xf32, #tpu.memory_space<vmem>>, vector<1x32xf32>
    %71 = vector.broadcast %70 : vector<1x32xf32> to vector<16x32xf32>
    %72 = arith.mulf %69, %71 : vector<16x32xf32>
    %c0_29 = arith.constant 0 : index
    %c0_30 = arith.constant 0 : index
    %73 = vector.load %arg9[%c0_29, %c0_30] : memref<1x32xf32, #tpu.memory_space<vmem>>, vector<1x32xf32>
    %74 = vector.broadcast %73 : vector<1x32xf32> to vector<16x32xf32>
    %75 = arith.addf %72, %74 : vector<16x32xf32>
    %c0_31 = arith.constant 0 : index
    %c0_32 = arith.constant 0 : index
    %76 = vector.load %arg10[%c0_31, %c0_32] : memref<32x64xf32, #tpu.memory_space<vmem>>, vector<32x64xf32>
    %cst_33 = arith.constant dense<0.000000e+00> : vector<16x64xf32>
    %77 = tpu.matmul %75, %76, %cst_33 {dimension_numbers = #tpu.dot_dimension_numbers<[1], [0], [0], [1], [0, 0, 1, 1], [], []>} : vector<16x32xf32>, vector<32x64xf32>, vector<16x64xf32> -> vector<16x64xf32>
    %c0_34 = arith.constant 0 : index
    %c0_35 = arith.constant 0 : index
    %78 = vector.load %arg11[%c0_34, %c0_35] : memref<1x64xf32, #tpu.memory_space<vmem>>, vector<1x64xf32>
    %79 = vector.broadcast %78 : vector<1x64xf32> to vector<16x64xf32>
    %80 = arith.addf %77, %79 : vector<16x64xf32>
    %cst_36 = arith.constant 0.000000e+00 : f32
    %81 = vector.broadcast %cst_36 : f32 to vector<16x64xf32>
    %82 = arith.maximumf %80, %81 : vector<16x64xf32>
    %c0_37 = arith.constant 0 : index
    %c0_38 = arith.constant 0 : index
    %83 = vector.load %arg12[%c0_37, %c0_38] : memref<64x32xf32, #tpu.memory_space<vmem>>, vector<64x32xf32>
    %cst_39 = arith.constant dense<0.000000e+00> : vector<16x32xf32>
    %84 = tpu.matmul %82, %83, %cst_39 {dimension_numbers = #tpu.dot_dimension_numbers<[1], [0], [0], [1], [0, 0, 1, 1], [], []>} : vector<16x64xf32>, vector<64x32xf32>, vector<16x32xf32> -> vector<16x32xf32>
    %c0_40 = arith.constant 0 : index
    %c0_41 = arith.constant 0 : index
    %85 = vector.load %arg13[%c0_40, %c0_41] : memref<1x32xf32, #tpu.memory_space<vmem>>, vector<1x32xf32>
    %86 = vector.broadcast %85 : vector<1x32xf32> to vector<16x32xf32>
    %87 = arith.addf %84, %86 : vector<16x32xf32>
    %88 = arith.addf %75, %87 : vector<16x32xf32>
    %cst_42 = arith.constant dense<0.000000e+00> : vector<16xf32>
    %89 = vector.multi_reduction <add>, %88, %cst_42 [1] : vector<16x32xf32> to vector<16xf32>
    %90 = vector.shape_cast %89 : vector<16xf32> to vector<16x1xf32>
    %cst_43 = arith.constant 3.200000e+01 : f32
    %91 = vector.broadcast %cst_43 : f32 to vector<16x1xf32>
    %92 = arith.divf %90, %91 : vector<16x1xf32>
    %93 = vector.broadcast %92 : vector<16x1xf32> to vector<16x32xf32>
    %94 = arith.subf %88, %93 : vector<16x32xf32>
    %95 = arith.mulf %94, %94 : vector<16x32xf32>
    %cst_44 = arith.constant dense<0.000000e+00> : vector<16xf32>
    %96 = vector.multi_reduction <add>, %95, %cst_44 [1] : vector<16x32xf32> to vector<16xf32>
    %97 = vector.shape_cast %96 : vector<16xf32> to vector<16x1xf32>
    %cst_45 = arith.constant 3.200000e+01 : f32
    %98 = vector.broadcast %cst_45 : f32 to vector<16x1xf32>
    %99 = arith.divf %97, %98 : vector<16x1xf32>
    %100 = vector.broadcast %92 : vector<16x1xf32> to vector<16x32xf32>
    %101 = arith.subf %88, %100 : vector<16x32xf32>
    %cst_46 = arith.constant 9.99999974E-6 : f32
    %102 = vector.broadcast %cst_46 : f32 to vector<16x1xf32>
    %103 = arith.addf %99, %102 : vector<16x1xf32>
    %104 = math.rsqrt %103 : vector<16x1xf32>
    %105 = vector.broadcast %104 : vector<16x1xf32> to vector<16x32xf32>
    %106 = arith.mulf %101, %105 : vector<16x32xf32>
    %c0_47 = arith.constant 0 : index
    %c0_48 = arith.constant 0 : index
    %107 = vector.load %arg14[%c0_47, %c0_48] : memref<1x32xf32, #tpu.memory_space<vmem>>, vector<1x32xf32>
    %108 = vector.broadcast %107 : vector<1x32xf32> to vector<16x32xf32>
    %109 = arith.mulf %106, %108 : vector<16x32xf32>
    %c0_49 = arith.constant 0 : index
    %c0_50 = arith.constant 0 : index
    %110 = vector.load %arg15[%c0_49, %c0_50] : memref<1x32xf32, #tpu.memory_space<vmem>>, vector<1x32xf32>
    %111 = vector.broadcast %110 : vector<1x32xf32> to vector<16x32xf32>
    %112 = arith.addf %109, %111 : vector<16x32xf32>
    %c0_51 = arith.constant 0 : index
    %c0_52 = arith.constant 0 : index
    %113 = vector.load %arg16[%c0_51, %c0_52] : memref<16x32xf32, #tpu.memory_space<vmem>>, vector<16x32xf32>
    tpu.vector_store %arg16[%c0_51, %c0_52], %112 {strides = array<i32>} : memref<16x32xf32, #tpu.memory_space<vmem>>, vector<16x32xf32>,
    return
  }
  func.func @transform_0(%arg0: i32) -> (i32, i32) {
    %c0_i32 = arith.constant 0 : i32
    %c0_i32_0 = arith.constant 0 : i32
    %c0_i32_1 = arith.constant 0 : i32
    return %c0_i32, %c0_i32_0 : i32, i32
  }
  func.func @transform_1(%arg0: i32) -> (i32, i32) {
    %c0_i32 = arith.constant 0 : i32
    %c0_i32_0 = arith.constant 0 : i32
    %c0_i32_1 = arith.constant 0 : i32
    return %c0_i32, %c0_i32_0 : i32, i32
  }
  func.func @transform_2(%arg0: i32) -> (i32, i32) {
    %c0_i32 = arith.constant 0 : i32
    %c0_i32_0 = arith.constant 0 : i32
    %c0_i32_1 = arith.constant 0 : i32
    return %c0_i32, %c0_i32_0 : i32, i32
  }
  func.func @transform_3(%arg0: i32) -> (i32, i32) {
    %c0_i32 = arith.constant 0 : i32
    %c0_i32_0 = arith.constant 0 : i32
    %c0_i32_1 = arith.constant 0 : i32
    return %c0_i32, %c0_i32_0 : i32, i32
  }
  func.func @transform_4(%arg0: i32) -> (i32, i32) {
    %c0_i32 = arith.constant 0 : i32
    %c0_i32_0 = arith.constant 0 : i32
    %c0_i32_1 = arith.constant 0 : i32
    return %c0_i32, %c0_i32_0 : i32, i32
  }
  func.func @transform_5(%arg0: i32) -> (i32, i32) {
    %c0_i32 = arith.constant 0 : i32
    %c0_i32_0 = arith.constant 0 : i32
    %c0_i32_1 = arith.constant 0 : i32
    return %c0_i32, %c0_i32_0 : i32, i32
  }
  func.func @transform_6(%arg0: i32) -> (i32, i32) {
    %c0_i32 = arith.constant 0 : i32
    %c0_i32_0 = arith.constant 0 : i32
    %c0_i32_1 = arith.constant 0 : i32
    return %c0_i32, %c0_i32_0 : i32, i32
  }
  func.func @transform_7(%arg0: i32) -> (i32, i32) {
    %c0_i32 = arith.constant 0 : i32
    %c0_i32_0 = arith.constant 0 : i32
    %c0_i32_1 = arith.constant 0 : i32
    return %c0_i32, %c0_i32_0 : i32, i32
  }
  func.func @transform_8(%arg0: i32) -> (i32, i32) {
    %c0_i32 = arith.constant 0 : i32
    %c0_i32_0 = arith.constant 0 : i32
    %c0_i32_1 = arith.constant 0 : i32
    return %c0_i32, %c0_i32_0 : i32, i32
  }
  func.func @transform_9(%arg0: i32) -> (i32, i32) {
    %c0_i32 = arith.constant 0 : i32
    %c0_i32_0 = arith.constant 0 : i32
    %c0_i32_1 = arith.constant 0 : i32
    return %c0_i32, %c0_i32_0 : i32, i32
  }
  func.func @transform_10(%arg0: i32) -> (i32, i32) {
    %c0_i32 = arith.constant 0 : i32
    %c0_i32_0 = arith.constant 0 : i32
    %c0_i32_1 = arith.constant 0 : i32
    return %c0_i32, %c0_i32_0 : i32, i32
  }
  func.func @transform_11(%arg0: i32) -> (i32, i32) {
    %c0_i32 = arith.constant 0 : i32
    %c0_i32_0 = arith.constant 0 : i32
    %c0_i32_1 = arith.constant 0 : i32
    return %c0_i32, %c0_i32_0 : i32, i32
  }
  func.func @transform_12(%arg0: i32) -> (i32, i32) {
    %c0_i32 = arith.constant 0 : i32
    %c0_i32_0 = arith.constant 0 : i32
    %c0_i32_1 = arith.constant 0 : i32
    return %c0_i32, %c0_i32_0 : i32, i32
  }
  func.func @transform_13(%arg0: i32) -> (i32, i32) {
    %c0_i32 = arith.constant 0 : i32
    %c0_i32_0 = arith.constant 0 : i32
    %c0_i32_1 = arith.constant 0 : i32
    return %c0_i32, %c0_i32_0 : i32, i32
  }
  func.func @transform_14(%arg0: i32) -> (i32, i32) {
    %c0_i32 = arith.constant 0 : i32
    %c0_i32_0 = arith.constant 0 : i32
    %c0_i32_1 = arith.constant 0 : i32
    return %c0_i32, %c0_i32_0 : i32, i32
  }
  func.func @transform_15(%arg0: i32) -> (i32, i32) {
    %c0_i32 = arith.constant 0 : i32
    %c0_i32_0 = arith.constant 0 : i32
    %c0_i32_1 = arith.constant 0 : i32
    return %c0_i32, %c0_i32_0 : i32, i32
  }
}

</mosaic_0001>

<llo_original>
// kernel: eq.15
$region0: #{eq.15}
  %s0 = inlined_call_operand.vmem [shape: s32[4,8], index: 0, kind: input, shape index: {}]
  %s1 = inlined_call_operand.vmem [shape: s32[32], index: 1, kind: output, shape index: {}]
  $region1: #{eq.15} parent=0
    #allocation0 [shape = 'u8[4096]{0}', space=vmem, size = 0x1000, scoped, tag = 'scoped mem for output reshape']
    #allocation1 [shape = 'u8[4096]{0}', space=vmem, size = 0x1000, scoped, tag = 'scoped mem for input reshape']
    %s3 = ssub.s32 16, 1
    %v4 = vld [vmem:[%s0] sm:%s3]
    %5 = vst [vmem:[#allocation1] sm:%s3] %v4
    %v6 = vld [vmem:[#allocation1] sm:$0x1]
    %vm7 = vcmask 64512
    %8 = vst.msk [vmem:[#allocation0] sm:$0x1] %vm7, %v6
    %s9 = scalar_lea.vmem [#allocation1], 3
    %v10 = vld [vmem:[%s9] sm:$0x1]
    %11 = vrot.lane.b32.xlu0 %v10, 24
    %v12 = vpop.permute.xlu0 %11
    %vm13 = vcmask 261312
    %14 = vst.msk [vmem:[#allocation0] sm:$0x1] %vm13, %v12
    %s15 = scalar_lea.vmem [#allocation1], 2
    %v16 = vld [vmem:[%s15] sm:$0x1]
    %17 = vrot.lane.b32.xlu0 %v16, 16
    %v18 = vpop.permute.xlu0 %17
    %vm19 = vcmask 195712
    %20 = vst.msk [vmem:[#allocation0] sm:$0x1] %vm19, %v18
    %s21 = scalar_lea.vmem [#allocation1], 1
    %v22 = vld [vmem:[%s21] sm:$0x1]
    %23 = vrot.lane.b32.xlu0 %v22, 8
    %v24 = vpop.permute.xlu0 %23
    %vm25 = vcmask 130112
    %26 = vst.msk [vmem:[#allocation0] sm:$0x1] %vm25, %v24
    %s28 = ssub.s32 2, 1
    %v29 = vld [vmem:[#allocation0] sm:%s28]
    %s31 = ssub.s32 2, 1
    %32 = vst [vmem:[%s1] sm:%s31] %v29

// kernel: transformer_encoder_block.1
$region0: #{transformer_encoder_block.1}
  #allocation0 [shape = 'u32[]', space=smem, size = 0x4, offset = 0x4, fixed_abs, tag = 'smem constant byte address 0x4 - core index']
  #allocation1 [shape = 'u32[72,128]{1,0:T(1,128)}', space=vmem, size = 0x9000, scoped, tag = 'internal scratch']
  %s0 = inlined_call_operand.vmem [shape: f32[16,32], index: 0, kind: input, shape index: {}]
  %s1 = inlined_call_operand.vmem [shape: f32[32,32], index: 1, kind: input, shape index: {}]
  %s2 = inlined_call_operand.vmem [shape: f32[32,32], index: 2, kind: input, shape index: {}]
  %s3 = inlined_call_operand.vmem [shape: f32[32,96], index: 3, kind: input, shape index: {}]
  %s4 = inlined_call_operand.vmem [shape: f32[1,96], index: 4, kind: input, shape index: {}]
  %s5 = inlined_call_operand.vmem [shape: f32[32,32], index: 5, kind: input, shape index: {}]
  %s6 = inlined_call_operand.vmem [shape: f32[1,32], index: 6, kind: input, shape index: {}]
  %s7 = inlined_call_operand.vmem [shape: f32[1,32], index: 7, kind: input, shape index: {}]
  %s8 = inlined_call_operand.vmem [shape: f32[1,32], index: 8, kind: input, shape index: {}]
  %s9 = inlined_call_operand.vmem [shape: f32[32,64], index: 9, kind: input, shape index: {}]
  %s10 = inlined_call_operand.vmem [shape: f32[1,64], index: 10, kind: input, shape index: {}]
  %s11 = inlined_call_operand.vmem [shape: f32[64,32], index: 11, kind: input, shape index: {}]
  %s12 = inlined_call_operand.vmem [shape: f32[1,32], index: 12, kind: input, shape index: {}]
  %s13 = inlined_call_operand.vmem [shape: f32[1,32], index: 13, kind: input, shape index: {}]
  %s14 = inlined_call_operand.vmem [shape: f32[1,32], index: 14, kind: input, shape index: {}]
  %s15 = inlined_call_operand.hbm [shape: f32[16,32], index: 15, kind: output, shape index: {}]
  %s16 = sld [smem:[#allocation0]]
  $region70: #{transformer_encoder_block.1} parent=0
    _
  %s18 = ssub.s32 1, %s16
  %s19 = scalar_select 0, %s18, %s16
  $region1: #{transformer_encoder_block.1} parent=0
    #allocation2 [shape = 'u8[8192]{0}', space=vmem, size = 0x2000, scoped, tag = 'output window, operand 0, single buffered']
    #allocation3 [shape = 's32[1]{0}', space=sflag, size = 0x4, scoped, tag = 'scoped memory for transformer_encoder_block.1']
    %20 = vsyncpa [#allocation3], 0
    // Predicated region
    $region2: #{transformer_encoder_block.1} parent=1 // pred_check
      _
    $region3: #{transformer_encoder_block.1} parent=1 // pred_check_branch
      %22 = sbr.rel (0) target = $region5
    $region4: #{transformer_encoder_block.1} parent=1 // pred_region
      _
    $region5: #{transformer_encoder_block.1} parent=1 // pred_fallthru
      _
    // Predicated region
    $region6: #{transformer_encoder_block.1} parent=1 // pred_check
      _
    $region7: #{transformer_encoder_block.1} parent=1 // pred_check_branch
      %24 = sbr.rel (0) target = $region9
    $region8: #{transformer_encoder_block.1} parent=1 // pred_region
      _
    $region9: #{transformer_encoder_block.1} parent=1 // pred_fallthru
      _
    // Predicated region
    $region10: #{transformer_encoder_block.1} parent=1 // pred_check
      _
    $region11: #{transformer_encoder_block.1} parent=1 // pred_check_branch
      %26 = sbr.rel (0) target = $region13
    $region12: #{transformer_encoder_block.1} parent=1 // pred_region
      _
    $region13: #{transformer_encoder_block.1} parent=1 // pred_fallthru
      _
    // Predicated region
    $region14: #{transformer_encoder_block.1} parent=1 // pred_check
      _
    $region15: #{transformer_encoder_block.1} parent=1 // pred_check_branch
      %28 = sbr.rel (0) target = $region17
    $region16: #{transformer_encoder_block.1} parent=1 // pred_region
      _
    $region17: #{transformer_encoder_block.1} parent=1 // pred_fallthru
      _
    // Predicated region
    $region18: #{transformer_encoder_block.1} parent=1 // pred_check
      _
    $region19: #{transformer_encoder_block.1} parent=1 // pred_check_branch
      %30 = sbr.rel (0) target = $region21
    $region20: #{transformer_encoder_block.1} parent=1 // pred_region
      _
    $region21: #{transformer_encoder_block.1} parent=1 // pred_fallthru
      _
    // Predicated region
    $region22: #{transformer_encoder_block.1} parent=1 // pred_check
      _
    $region23: #{transformer_encoder_block.1} parent=1 // pred_check_branch
      %32 = sbr.rel (0) target = $region25
    $region24: #{transformer_encoder_block.1} parent=1 // pred_region
      _
    $region25: #{transformer_encoder_block.1} parent=1 // pred_fallthru
      _
    // Predicated region
    $region26: #{transformer_encoder_block.1} parent=1 // pred_check
      _
    $region27: #{transformer_encoder_block.1} parent=1 // pred_check_branch
      %34 = sbr.rel (0) target = $region29
    $region28: #{transformer_encoder_block.1} parent=1 // pred_region
      _
    $region29: #{transformer_encoder_block.1} parent=1 // pred_fallthru
      _
    // Predicated region
    $region30: #{transformer_encoder_block.1} parent=1 // pred_check
      _
    $region31: #{transformer_encoder_block.1} parent=1 // pred_check_branch
      %36 = sbr.rel (0) target = $region33
    $region32: #{transformer_encoder_block.1} parent=1 // pred_region
      _
    $region33: #{transformer_encoder_block.1} parent=1 // pred_fallthru
      _
    // Predicated region
    $region34: #{transformer_encoder_block.1} parent=1 // pred_check
      _
    $region35: #{transformer_encoder_block.1} parent=1 // pred_check_branch
      %38 = sbr.rel (0) target = $region37
    $region36: #{transformer_encoder_block.1} parent=1 // pred_region
      _
    $region37: #{transformer_encoder_block.1} parent=1 // pred_fallthru
      _
    // Predicated region
    $region38: #{transformer_encoder_block.1} parent=1 // pred_check
      _
    $region39: #{transformer_encoder_block.1} parent=1 // pred_check_branch
      %40 = sbr.rel (0) target = $region41
    $region40: #{transformer_encoder_block.1} parent=1 // pred_region
      _
    $region41: #{transformer_encoder_block.1} parent=1 // pred_fallthru
      _
    // Predicated region
    $region42: #{transformer_encoder_block.1} parent=1 // pred_check
      _
    $region43: #{transformer_encoder_block.1} parent=1 // pred_check_branch
      %42 = sbr.rel (0) target = $region45
    $region44: #{transformer_encoder_block.1} parent=1 // pred_region
      _
    $region45: #{transformer_encoder_block.1} parent=1 // pred_fallthru
      _
    // Predicated region
    $region46: #{transformer_encoder_block.1} parent=1 // pred_check
      _
    $region47: #{transformer_encoder_block.1} parent=1 // pred_check_branch
      %44 = sbr.rel (0) target = $region49
    $region48: #{transformer_encoder_block.1} parent=1 // pred_region
      _
    $region49: #{transformer_encoder_block.1} parent=1 // pred_fallthru
      _
    // Predicated region
    $region50: #{transformer_encoder_block.1} parent=1 // pred_check
      _
    $region51: #{transformer_encoder_block.1} parent=1 // pred_check_branch
      %46 = sbr.rel (0) target = $region53
    $region52: #{transformer_encoder_block.1} parent=1 // pred_region
      _
    $region53: #{transformer_encoder_block.1} parent=1 // pred_fallthru
      _
    // Predicated region
    $region54: #{transformer_encoder_block.1} parent=1 // pred_check
      _
    $region55: #{transformer_encoder_block.1} parent=1 // pred_check_branch
      %48 = sbr.rel (0) target = $region57
    $region56: #{transformer_encoder_block.1} parent=1 // pred_region
      _
    $region57: #{transformer_encoder_block.1} parent=1 // pred_fallthru
      _
    // Predicated region
    $region58: #{transformer_encoder_block.1} parent=1 // pred_check
      _
    $region59: #{transformer_encoder_block.1} parent=1 // pred_check_branch
      %50 = sbr.rel (0) target = $region61
    $region60: #{transformer_encoder_block.1} parent=1 // pred_region
      _
    $region61: #{transformer_encoder_block.1} parent=1 // pred_fallthru
      _
    %v51 = vld [vmem:[%s0] sm:$0xff]
    %v52 = vld [vmem:[%s0 + $0x8] sm:$0xff]
    %v53 = vld [vmem:[%s1] sm:$0xff]
    %v54 = vld [vmem:[%s1 + $0x8] sm:$0xff]
    %v55 = vld [vmem:[%s1 + $0x10] sm:$0xff]
    %v56 = vld [vmem:[%s1 + $0x18] sm:$0xff]
    %v57 = vld [vmem:[%s2] sm:$0xff]
    %v58 = vld [vmem:[%s2 + $0x8] sm:$0xff]
    %v59 = vld [vmem:[%s2 + $0x10] sm:$0xff]
    %v60 = vld [vmem:[%s2 + $0x18] sm:$0xff]
    %v61 = vld [vmem:[%s3] sm:$0xff]
    %v62 = vld [vmem:[%s3 + $0x8] sm:$0xff]
    %v63 = vld [vmem:[%s3 + $0x10] sm:$0xff]
    %v64 = vld [vmem:[%s3 + $0x18] sm:$0xff]
    %v65 = vld [vmem:[%s4] sm:$0x1]
    %v67 = vperm.slane %v65, 0
    %vm69 = vcmask 261120
    %v71 = vsel %vm69, %v51, 0
    %v74 = vsel %vm69, %v52, 0
    %76 = vmatpush.msra.mxu0 0.0
    %77 = vmatpush.msra.mxu0 0.0
    %78 = vmatpush.msra.mxu0 0.0
    %79 = vmatpush.msra.mxu0 0.0
    %80 = vmatpush.msra.mxu0 0.0
    %81 = vmatpush.msra.mxu0 0.0
    %82 = vmatpush.msra.mxu0 0.0
    %83 = vmatpush.msra.mxu0 0.0
    %84 = vmatpush.msra.mxu0 0.0
    %85 = vmatpush.msra.mxu0 0.0
    %86 = vmatpush.msra.mxu0 0.0
    %87 = vmatpush.msra.mxu0 0.0
    %88 = vmatpush.msra.mxu0 %v64
    %89 = vmatpush.msra.mxu0 %v63
    %90 = vmatpush.msra.mxu0 %v62
    %91 = vmatpush.msra.mxu0 %v61
    %92 = vmatmul.f32.gmra.mxu0 %v71
    %v93 = vpop.f32.mrf.mxu0
    %v94 = vadd.f32 %v67, %v93
    %95 = vmatmul.f32.gmra.mxu0 %v74
    %v96 = vpop.f32.mrf.mxu0
    %v97 = vadd.f32 %v67, %v96
    %98 = vdwg.mxu0
    %103 = vrot.lane.b32.xlu0 %v53, 32
    %v104 = vpop.permute.xlu0 %103
    %105 = vrot.lane.b32.xlu0 %v54, 32
    %v106 = vpop.permute.xlu0 %105
    %107 = vrot.lane.b32.xlu0 %v55, 32
    %v108 = vpop.permute.xlu0 %107
    %109 = vrot.lane.b32.xlu0 %v56, 32
    %v110 = vpop.permute.xlu0 %109
    %v115 = vmul.f32 %v94, %v104
    %v116 = vmul.f32 %v94, %v106
    %v117 = vmul.f32 %v94, %v108
    %v118 = vmul.f32 %v94, %v110
    %119 = vrot.lane.b32.xlu0 %v53, 64
    %v120 = vpop.permute.xlu0 %119
    %121 = vrot.lane.b32.xlu0 %v54, 64
    %v122 = vpop.permute.xlu0 %121
    %123 = vrot.lane.b32.xlu0 %v55, 64
    %v124 = vpop.permute.xlu0 %123
    %125 = vrot.lane.b32.xlu0 %v56, 64
    %v126 = vpop.permute.xlu0 %125
    %v131 = vmul.f32 %v94, %v120
    %v132 = vmul.f32 %v94, %v122
    %v133 = vmul.f32 %v94, %v124
    %v134 = vmul.f32 %v94, %v126
    %139 = vrot.lane.b32.xlu0 %v115, 96
    %v140 = vpop.permute.xlu0 %139
    %141 = vrot.lane.b32.xlu0 %v116, 96
    %v142 = vpop.permute.xlu0 %141
    %143 = vrot.lane.b32.xlu0 %v117, 96
    %v144 = vpop.permute.xlu0 %143
    %145 = vrot.lane.b32.xlu0 %v118, 96
    %v146 = vpop.permute.xlu0 %145
    %v148 = vsel %vm69, %v94, 0
    %v150 = vsel %vm69, %v140, 0
    %v152 = vsel %vm69, %v142, 0
    %v154 = vsel %vm69, %v144, 0
    %v156 = vsel %vm69, %v146, 0
    %158 = vmatpush.xpose.msra.mxu0 0.0
    %159 = vmatpush.xpose.msra.mxu0 0.0
    %160 = vmatpush.xpose.msra.mxu0 0.0
    %161 = vmatpush.xpose.msra.mxu0 0.0
    %162 = vmatpush.xpose.msra.mxu0 0.0
    %163 = vmatpush.xpose.msra.mxu0 0.0
    %164 = vmatpush.xpose.msra.mxu0 0.0
    %165 = vmatpush.xpose.msra.mxu0 0.0
    %166 = vmatpush.xpose.msra.mxu0 0.0
    %167 = vmatpush.xpose.msra.mxu0 0.0
    %168 = vmatpush.xpose.msra.mxu0 0.0
    %169 = vmatpush.xpose.msra.mxu0 0.0
    %170 = vmatpush.xpose.msra.mxu0 %v156
    %171 = vmatpush.xpose.msra.mxu0 %v154
    %172 = vmatpush.xpose.msra.mxu0 %v152
    %173 = vmatpush.xpose.msra.mxu0 %v150
    %174 = vmatmul.f32.gmra.mxu0 %v148
    %v175 = vpop.f32.mrf.mxu0
    %v176 = vadd.f32 0.0, %v175
    %177 = vdwg.mxu0
    %v178 = vsel %vm69, %v176, -inf
    %179 = vmax.xlane.f32.xlu0 %v178
    %v180 = vpop.xlane.xlu0 %179
    %v181 = vsub.f32 %v176, %v180
    %v182 = vmul.f32 %v181, 1.442695
    %v183 = vpow.pop %v182
    %v185 = vsel %vm69, %v183, 0
    %187 = vmatpush.msra.mxu0 0.0
    %188 = vmatpush.msra.mxu0 0.0
    %189 = vmatpush.msra.mxu0 0.0
    %190 = vmatpush.msra.mxu0 0.0
    %191 = vmatpush.msra.mxu0 0.0
    %192 = vmatpush.msra.mxu0 0.0
    %193 = vmatpush.msra.mxu0 0.0
    %194 = vmatpush.msra.mxu0 0.0
    %195 = vmatpush.msra.mxu0 0.0
    %196 = vmatpush.msra.mxu0 0.0
    %197 = vmatpush.msra.mxu0 0.0
    %198 = vmatpush.msra.mxu0 0.0
    %199 = vmatpush.msra.mxu0 %v60
    %200 = vmatpush.msra.mxu0 %v59
    %201 = vmatpush.msra.mxu0 %v58
    %202 = vmatpush.msra.mxu0 %v57
    %203 = vmatmul.f32.gmra.mxu0 %v185
    %v204 = vpop.f32.mrf.mxu0
    %v205 = vadd.f32 0.0, %v204
    %206 = vdwg.mxu0
    %v207 = vrcp.pop %v205
    %v208 = vmul.f32 %v183, %v207
    %213 = vrot.lane.b32.xlu0 %v131, 64
    %v214 = vpop.permute.xlu0 %213
    %215 = vrot.lane.b32.xlu0 %v132, 64
    %v216 = vpop.permute.xlu0 %215
    %217 = vrot.lane.b32.xlu0 %v133, 64
    %v218 = vpop.permute.xlu0 %217
    %219 = vrot.lane.b32.xlu0 %v134, 64
    %v220 = vpop.permute.xlu0 %219
    %v226 = vsel %vm69, %v208, 0
    %228 = vmatpush.msra.mxu0 0.0
    %229 = vmatpush.msra.mxu0 0.0
    %230 = vmatpush.msra.mxu0 0.0
    %231 = vmatpush.msra.mxu0 0.0
    %232 = vmatpush.msra.mxu0 0.0
    %233 = vmatpush.msra.mxu0 0.0
    %234 = vmatpush.msra.mxu0 0.0
    %235 = vmatpush.msra.mxu0 0.0
    %236 = vmatpush.msra.mxu0 0.0
    %237 = vmatpush.msra.mxu0 0.0
    %238 = vmatpush.msra.mxu0 0.0
    %239 = vmatpush.msra.mxu0 0.0
    %240 = vmatpush.msra.mxu0 %v220
    %241 = vmatpush.msra.mxu0 %v218
    %242 = vmatpush.msra.mxu0 %v216
    %243 = vmatpush.msra.mxu0 %v214
    %244 = vmatmul.f32.gmra.mxu0 %v226
    %v245 = vpop.f32.mrf.mxu0
    %v246 = vadd.f32 0.0, %v245
    %247 = vdwg.mxu0
    %v248 = vmul.f32 %v97, %v104
    %v249 = vmul.f32 %v97, %v106
    %v250 = vmul.f32 %v97, %v108
    %v251 = vmul.f32 %v97, %v110
    %v252 = vmul.f32 %v97, %v120
    %v253 = vmul.f32 %v97, %v122
    %v254 = vmul.f32 %v97, %v124
    %v255 = vmul.f32 %v97, %v126
    %260 = vrot.lane.b32.xlu0 %v248, 96
    %v261 = vpop.permute.xlu0 %260
    %262 = vrot.lane.b32.xlu0 %v249, 96
    %v263 = vpop.permute.xlu0 %262
    %264 = vrot.lane.b32.xlu0 %v250, 96
    %v265 = vpop.permute.xlu0 %264
    %266 = vrot.lane.b32.xlu0 %v251, 96
    %v267 = vpop.permute.xlu0 %266
    %v269 = vsel %vm69, %v97, 0
    %v271 = vsel %vm69, %v261, 0
    %v273 = vsel %vm69, %v263, 0
    %v275 = vsel %vm69, %v265, 0
    %v277 = vsel %vm69, %v267, 0
    %279 = vmatpush.xpose.msra.mxu0 0.0
    %280 = vmatpush.xpose.msra.mxu0 0.0
    %281 = vmatpush.xpose.msra.mxu0 0.0
    %282 = vmatpush.xpose.msra.mxu0 0.0
    %283 = vmatpush.xpose.msra.mxu0 0.0
    %284 = vmatpush.xpose.msra.mxu0 0.0
    %285 = vmatpush.xpose.msra.mxu0 0.0
    %286 = vmatpush.xpose.msra.mxu0 0.0
    %287 = vmatpush.xpose.msra.mxu0 0.0
    %288 = vmatpush.xpose.msra.mxu0 0.0
    %289 = vmatpush.xpose.msra.mxu0 0.0
    %290 = vmatpush.xpose.msra.mxu0 0.0
    %291 = vmatpush.xpose.msra.mxu0 %v277
    %292 = vmatpush.xpose.msra.mxu0 %v275
    %293 = vmatpush.xpose.msra.mxu0 %v273
    %294 = vmatpush.xpose.msra.mxu0 %v271
    %295 = vmatmul.f32.gmra.mxu0 %v269
    %v296 = vpop.f32.mrf.mxu0
    %v297 = vadd.f32 0.0, %v296
    %298 = vdwg.mxu0
    %v299 = vsel %vm69, %v297, -inf
    %300 = vmax.xlane.f32.xlu0 %v299
    %v301 = vpop.xlane.xlu0 %300
    %v302 = vsub.f32 %v297, %v301
    %v303 = vmul.f32 %v302, 1.442695
    %v304 = vpow.pop %v303
    %v306 = vsel %vm69, %v304, 0
    %308 = vmatpush.msra.mxu0 0.0
    %309 = vmatpush.msra.mxu0 0.0
    %310 = vmatpush.msra.mxu0 0.0
    %311 = vmatpush.msra.mxu0 0.0
    %312 = vmatpush.msra.mxu0 0.0
    %313 = vmatpush.msra.mxu0 0.0
    %314 = vmatpush.msra.mxu0 0.0
    %315 = vmatpush.msra.mxu0 0.0
    %316 = vmatpush.msra.mxu0 0.0
    %317 = vmatpush.msra.mxu0 0.0
    %318 = vmatpush.msra.mxu0 0.0
    %319 = vmatpush.msra.mxu0 0.0
    %320 = vmatpush.msra.mxu0 %v60
    %321 = vmatpush.msra.mxu0 %v59
    %322 = vmatpush.msra.mxu0 %v58
    %323 = vmatpush.msra.mxu0 %v57
    %324 = vmatmul.f32.gmra.mxu0 %v306
    %v325 = vpop.f32.mrf.mxu0
    %v326 = vadd.f32 0.0, %v325
    %327 = vdwg.mxu0
    %v328 = vrcp.pop %v326
    %v329 = vmul.f32 %v304, %v328
    %334 = vrot.lane.b32.xlu0 %v252, 64
    %v335 = vpop.permute.xlu0 %334
    %336 = vrot.lane.b32.xlu0 %v253, 64
    %v337 = vpop.permute.xlu0 %336
    %338 = vrot.lane.b32.xlu0 %v254, 64
    %v339 = vpop.permute.xlu0 %338
    %340 = vrot.lane.b32.xlu0 %v255, 64
    %v341 = vpop.permute.xlu0 %340
    %v347 = vsel %vm69, %v329, 0
    %349 = vmatpush.msra.mxu0 0.0
    %350 = vmatpush.msra.mxu0 0.0
    %351 = vmatpush.msra.mxu0 0.0
    %352 = vmatpush.msra.mxu0 0.0
    %353 = vmatpush.msra.mxu0 0.0
    %354 = vmatpush.msra.mxu0 0.0
    %355 = vmatpush.msra.mxu0 0.0
    %356 = vmatpush.msra.mxu0 0.0
    %357 = vmatpush.msra.mxu0 0.0
    %358 = vmatpush.msra.mxu0 0.0
    %359 = vmatpush.msra.mxu0 0.0
    %360 = vmatpush.msra.mxu0 0.0
    %361 = vmatpush.msra.mxu0 %v341
    %362 = vmatpush.msra.mxu0 %v339
    %363 = vmatpush.msra.mxu0 %v337
    %364 = vmatpush.msra.mxu0 %v335
    %365 = vmatmul.f32.gmra.mxu0 %v347
    %v366 = vpop.f32.mrf.mxu0
    %v367 = vadd.f32 0.0, %v366
    %368 = vdwg.mxu0
    %v369 = vld [vmem:[%s5] sm:$0xff]
    %v370 = vld [vmem:[%s5 + $0x8] sm:$0xff]
    %v371 = vld [vmem:[%s5 + $0x10] sm:$0xff]
    %v372 = vld [vmem:[%s5 + $0x18] sm:$0xff]
    %v373 = vld [vmem:[%s6] sm:$0x1]
    %v375 = vperm.slane %v373, 0
    %v378 = vsel %vm69, %v246, 0
    %v381 = vsel %vm69, %v367, 0
    %383 = vmatpush.msra.mxu0 0.0
    %384 = vmatpush.msra.mxu0 0.0
    %385 = vmatpush.msra.mxu0 0.0
    %386 = vmatpush.msra.mxu0 0.0
    %387 = vmatpush.msra.mxu0 0.0
    %388 = vmatpush.msra.mxu0 0.0
    %389 = vmatpush.msra.mxu0 0.0
    %390 = vmatpush.msra.mxu0 0.0
    %391 = vmatpush.msra.mxu0 0.0
    %392 = vmatpush.msra.mxu0 0.0
    %393 = vmatpush.msra.mxu0 0.0
    %394 = vmatpush.msra.mxu0 0.0
    %395 = vmatpush.msra.mxu0 %v372
    %396 = vmatpush.msra.mxu0 %v371
    %397 = vmatpush.msra.mxu0 %v370
    %398 = vmatpush.msra.mxu0 %v369
    %399 = vmatmul.f32.gmra.mxu0 %v378
    %v400 = vpop.f32.mrf.mxu0
    %v401 = vadd.f32 %v375, %v400
    %402 = vmatmul.f32.gmra.mxu0 %v381
    %v403 = vpop.f32.mrf.mxu0
    %v404 = vadd.f32 %v375, %v403
    %405 = vdwg.mxu0
    %v406 = vadd.f32 %v51, %v401
    %v407 = vadd.f32 %v52, %v404
    %v408 = vsel %vm69, %v406, 0.0
    %409 = vadd.xlane.f32.xlu0 %v408
    %v410 = vpop.xlane.xlu0 %409
    %v411 = vsel %vm69, %v407, 0.0
    %412 = vadd.xlane.f32.xlu0 %v411
    %v413 = vpop.xlane.xlu0 %412
    %v414 = vrcp.pop 32.0
    %v415 = vmul.f32 32.0, %v414
    %v416 = vsub.f32 1.0, %v415
    %v417 = vmul.f32 %v414, %v416
    %v418 = vadd.f32 %v414, %v417
    %vm419 = vweird.f32 %v414
    %v420 = vsel %vm419, %v414, %v418
    %v421 = vmul.f32 %v410, %v420
    %v422 = vmul.f32 %v413, %v420
    %v423 = vsub.f32 %v406, %v421
    %v424 = vsub.f32 %v407, %v422
    %v425 = vmul.f32 %v423, %v423
    %v426 = vmul.f32 %v424, %v424
    %v427 = vsel %vm69, %v425, 0.0
    %428 = vadd.xlane.f32.xlu0 %v427
    %v429 = vpop.xlane.xlu0 %428
    %v430 = vsel %vm69, %v426, 0.0
    %431 = vadd.xlane.f32.xlu0 %v430
    %v432 = vpop.xlane.xlu0 %431
    %v433 = vmul.f32 %v429, %v420
    %v434 = vmul.f32 %v432, %v420
    %v435 = vadd.f32 %v433, 1e-05
    %v436 = vadd.f32 %v434, 1e-05
    %v437 = vrsqrt.pop %v435
    %v438 = vmul.f32 %v437, %v435
    %v439 = vmul.f32 %v438, %v437
    %v440 = vmul.f32 0.5, %v439
    %v441 = vsub.f32 1.5, %v440
    %v442 = vmul.f32 %v437, %v441
    %vm443 = vweird.f32 %v435
    %vm444 = vweird.f32 %v437
    %vm445 = vmor %vm443, %vm444
    %v446 = vsel %vm445, %v437, %v442
    %v447 = vrsqrt.pop %v436
    %v448 = vmul.f32 %v447, %v436
    %v449 = vmul.f32 %v448, %v447
    %v450 = vmul.f32 0.5, %v449
    %v451 = vsub.f32 1.5, %v450
    %v452 = vmul.f32 %v447, %v451
    %vm453 = vweird.f32 %v436
    %vm454 = vweird.f32 %v447
    %vm455 = vmor %vm453, %vm454
    %v456 = vsel %vm455, %v447, %v452
    %v457 = vmul.f32 %v423, %v446
    %v458 = vmul.f32 %v424, %v456
    %v459 = vld [vmem:[%s7] sm:$0x1]
    %v461 = vperm.slane %v459, 0
    %v463 = vmul.f32 %v457, %v461
    %v464 = vmul.f32 %v458, %v461
    %v465 = vld [vmem:[%s8] sm:$0x1]
    %v467 = vperm.slane %v465, 0
    %v469 = vadd.f32 %v463, %v467
    %v470 = vadd.f32 %v464, %v467
    %v471 = vld [vmem:[%s9] sm:$0xff]
    %v472 = vld [vmem:[%s9 + $0x8] sm:$0xff]
    %v473 = vld [vmem:[%s9 + $0x10] sm:$0xff]
    %v474 = vld [vmem:[%s9 + $0x18] sm:$0xff]
    %v475 = vld [vmem:[%s10] sm:$0x1]
    %v477 = vperm.slane %v475, 0
    %v480 = vsel %vm69, %v469, 0
    %v483 = vsel %vm69, %v470, 0
    %485 = vmatpush.msra.mxu0 0.0
    %486 = vmatpush.msra.mxu0 0.0
    %487 = vmatpush.msra.mxu0 0.0
    %488 = vmatpush.msra.mxu0 0.0
    %489 = vmatpush.msra.mxu0 0.0
    %490 = vmatpush.msra.mxu0 0.0
    %491 = vmatpush.msra.mxu0 0.0
    %492 = vmatpush.msra.mxu0 0.0
    %493 = vmatpush.msra.mxu0 0.0
    %494 = vmatpush.msra.mxu0 0.0
    %495 = vmatpush.msra.mxu0 0.0
    %496 = vmatpush.msra.mxu0 0.0
    %497 = vmatpush.msra.mxu0 %v474
    %498 = vmatpush.msra.mxu0 %v473
    %499 = vmatpush.msra.mxu0 %v472
    %500 = vmatpush.msra.mxu0 %v471
    %501 = vmatmul.f32.gmra.mxu0 %v480
    %v502 = vpop.f32.mrf.mxu0
    %v503 = vadd.f32 %v477, %v502
    %504 = vmatmul.f32.gmra.mxu0 %v483
    %v505 = vpop.f32.mrf.mxu0
    %v506 = vadd.f32 %v477, %v505
    %507 = vdwg.mxu0
    %v508 = vmax.f32 %v503, 0.0
    %v509 = vmax.f32 %v506, 0.0
    %v510 = vld [vmem:[%s11] sm:$0xff]
    %v511 = vld [vmem:[%s11 + $0x8] sm:$0xff]
    %v512 = vld [vmem:[%s11 + $0x10] sm:$0xff]
    %v513 = vld [vmem:[%s11 + $0x18] sm:$0xff]
    %v514 = vld [vmem:[%s11 + $0x20] sm:$0xff]
    %v515 = vld [vmem:[%s11 + $0x28] sm:$0xff]
    %v516 = vld [vmem:[%s11 + $0x30] sm:$0xff]
    %v517 = vld [vmem:[%s11 + $0x38] sm:$0xff]
    %v518 = vld [vmem:[%s12] sm:$0x1]
    %v520 = vperm.slane %v518, 0
    %vm522 = vcmask 523264
    %v524 = vsel %vm522, %v508, 0
    %v527 = vsel %vm522, %v509, 0
    %529 = vmatpush.msra.mxu0 0.0
    %530 = vmatpush.msra.mxu0 0.0
    %531 = vmatpush.msra.mxu0 0.0
    %532 = vmatpush.msra.mxu0 0.0
    %533 = vmatpush.msra.mxu0 0.0
    %534 = vmatpush.msra.mxu0 0.0
    %535 = vmatpush.msra.mxu0 0.0
    %536 = vmatpush.msra.mxu0 0.0
    %537 = vmatpush.msra.mxu0 %v517
    %538 = vmatpush.msra.mxu0 %v516
    %539 = vmatpush.msra.mxu0 %v515
    %540 = vmatpush.msra.mxu0 %v514
    %541 = vmatpush.msra.mxu0 %v513
    %542 = vmatpush.msra.mxu0 %v512
    %543 = vmatpush.msra.mxu0 %v511
    %544 = vmatpush.msra.mxu0 %v510
    %545 = vmatmul.f32.gmra.mxu0 %v524
    %v546 = vpop.f32.mrf.mxu0
    %v547 = vadd.f32 %v520, %v546
    %548 = vmatmul.f32.gmra.mxu0 %v527
    %v549 = vpop.f32.mrf.mxu0
    %v550 = vadd.f32 %v520, %v549
    %551 = vdwg.mxu0
    %v552 = vadd.f32 %v469, %v547
    %v553 = vadd.f32 %v470, %v550
    %v554 = vsel %vm69, %v552, 0.0
    %555 = vadd.xlane.f32.xlu0 %v554
    %v556 = vpop.xlane.xlu0 %555
    %v557 = vsel %vm69, %v553, 0.0
    %558 = vadd.xlane.f32.xlu0 %v557
    %v559 = vpop.xlane.xlu0 %558
    %v560 = vmul.f32 %v556, %v420
    %v561 = vmul.f32 %v559, %v420
    %v562 = vsub.f32 %v552, %v560
    %v563 = vsub.f32 %v553, %v561
    %v564 = vmul.f32 %v562, %v562
    %v565 = vmul.f32 %v563, %v563
    %v566 = vsel %vm69, %v564, 0.0
    %567 = vadd.xlane.f32.xlu0 %v566
    %v568 = vpop.xlane.xlu0 %567
    %v569 = vsel %vm69, %v565, 0.0
    %570 = vadd.xlane.f32.xlu0 %v569
    %v571 = vpop.xlane.xlu0 %570
    %v572 = vmul.f32 %v568, %v420
    %v573 = vmul.f32 %v571, %v420
    %v574 = vadd.f32 %v572, 1e-05
    %v575 = vadd.f32 %v573, 1e-05
    %v576 = vrsqrt.pop %v574
    %v577 = vmul.f32 %v576, %v574
    %v578 = vmul.f32 %v577, %v576
    %v579 = vmul.f32 0.5, %v578
    %v580 = vsub.f32 1.5, %v579
    %v581 = vmul.f32 %v576, %v580
    %vm582 = vweird.f32 %v574
    %vm583 = vweird.f32 %v576
    %vm584 = vmor %vm582, %vm583
    %v585 = vsel %vm584, %v576, %v581
    %v586 = vrsqrt.pop %v575
    %v587 = vmul.f32 %v586, %v575
    %v588 = vmul.f32 %v587, %v586
    %v589 = vmul.f32 0.5, %v588
    %v590 = vsub.f32 1.5, %v589
    %v591 = vmul.f32 %v586, %v590
    %vm592 = vweird.f32 %v575
    %vm593 = vweird.f32 %v586
    %vm594 = vmor %vm592, %vm593
    %v595 = vsel %vm594, %v586, %v591
    %v596 = vmul.f32 %v562, %v585
    %v597 = vmul.f32 %v563, %v595
    %v598 = vld [vmem:[%s13] sm:$0x1]
    %v600 = vperm.slane %v598, 0
    %v602 = vmul.f32 %v596, %v600
    %v603 = vmul.f32 %v597, %v600
    %v604 = vld [vmem:[%s14] sm:$0x1]
    %v606 = vperm.slane %v604, 0
    %v608 = vadd.f32 %v602, %v606
    %v609 = vadd.f32 %v603, %v606
    %610 = vst.msk [vmem:[#allocation2] sm:$0xff] %vm69, %v608
    %611 = vst.msk [vmem:[#allocation2 + $0x8] sm:$0xff] %vm69, %v609
    // Predicated region
    $region62: #{transformer_encoder_block.1} parent=1 // pred_check
      _
    $region63: #{transformer_encoder_block.1} parent=1 // pred_check_branch
      %613 = sbr.rel (0) target = $region65
    $region64: #{transformer_encoder_block.1} parent=1 // pred_region
      %615 = vsyncadd [#allocation3], 0
      %s616 = sshll.u32 [#allocation2], 4
      %s617 = int_to_ptr.vmem [resolvable:$true] %s616
      %s618 = sshll.u32 %s15, 4
      %s619 = int_to_ptr.hbm [resolvable:$true] %s618
      %624 = dma.vmem_to_hbm [thread:$0]  %s617, 256, %s619, [#allocation3], 128, 128, 8
    $region65: #{transformer_encoder_block.1} parent=1 // pred_fallthru
      _
    // Predicated region
    $region66: #{transformer_encoder_block.1} parent=1 // pred_check
      _
    $region67: #{transformer_encoder_block.1} parent=1 // pred_check_branch
      %626 = sbr.rel (0) target = $region69
    $region68: #{transformer_encoder_block.1} parent=1 // pred_region
      %628 = dma.done [#allocation3], 256
    $region69: #{transformer_encoder_block.1} parent=1 // pred_fallthru
      _
    %629 = vsyncpa [#allocation3], 1

</llo_original>
